<compile_context>
chip_gen: v5e
topology: v5e:2x2
jax: 0.10.0
libtpu: 0.0.40
codegen_flags: <defaults>
</compile_context>

<pallas_src>
import jax
import jax.numpy as jnp
from jax.experimental import pallas as pl
from jax.experimental.pallas import tpu as pltpu


# ~8 MiB per hidden buffer -> 16 MiB double-buffered + small mask/out/weight
# blocks: fits comfortably under v7x's 64 MiB physical VMEM and the raised
# scoped limit below, while still being large enough to amortize the ~0.35 us
# per-grid-step overhead and keep the HBM pipe saturated on v5e/v6e/v7x.
_HIDDEN_TILE_BUDGET_BYTES = 8 * 1024 * 1024
_VMEM_LIMIT_BYTES = 48 * 1024 * 1024   # > v5e 16 MiB / v6e-v7x 32 MiB defaults


def _dot_attention_kernel(hidden_ref, mask_ref, w_ref, out_ref):
    # hidden_ref: (TB, S, H); mask_ref: (TB, S); w_ref: (1, H) pre-scaled by
    # 1/sqrt(H); out_ref: (TB, S).
    h = hidden_ref[...].astype(jnp.float32)
    m = mask_ref[...].astype(jnp.float32)
    w = w_ref[...].astype(jnp.float32)                      # (1, H)

    # Linear(H -> 1, bias=False): N=1 would use 1/128-1/256 of the MXU and
    # leave a lane-sparse (B,S,1) result, so do it on the VPU/XLU instead.
    scores = jnp.sum(h * w[:, None, :], axis=-1)            # (TB, S)

    # allennlp masked_softmax (memory_efficient=False):
    #   p = softmax(scores * mask); p = p * mask; p = p / (p.sum(-1) + 1e-13)
    z = scores * m
    z = z - jnp.max(z, axis=-1, keepdims=True)              # stable softmax
    p = jnp.exp(z)
    p = p * pl.reciprocal(jnp.sum(p, axis=-1, keepdims=True), approx=True)
    p = p * m
    denom = jnp.sum(p, axis=-1, keepdims=True) + 1e-13
    out_ref[...] = (p * pl.reciprocal(denom, approx=True)).astype(out_ref.dtype)


def _pick_batch_block(batch, seq, hidden_size, itemsize):
    """Largest batch tile whose hidden block fits the per-buffer VMEM budget
    and divides the batch exactly (no partial blocks)."""
    bytes_per_row = seq * hidden_size * itemsize
    tb = max(1, min(batch, _HIDDEN_TILE_BUDGET_BYTES // max(bytes_per_row, 1)))
    while batch % tb:
        tb -= 1
    if tb < batch and tb % 8:
        # Prefer a sublane-aligned (multiple-of-8) tile for the (TB, S)
        # mask/out blocks; fall back to the plain divisor if none exists.
        cand = (tb // 8) * 8
        while cand >= 8 and batch % cand:
            cand -= 8
        if cand >= 8:
            tb = cand
    return tb


def dot_attention(hidden, masks, weight):
    """hidden: [B, S, H] (f32 or bf16), masks: [B, S] (0/1), weight: [1, H].

    Returns [B, S] float32 attention weights (allennlp masked_softmax).
    """
    B, S, H = hidden.shape
    tb = _pick_batch_block(B, S, H, hidden.dtype.itemsize)
    grid = (B // tb,)

    # Fold the 1/sqrt(H) score scale into the (1, H) weight: scales H values
    # once per call instead of B*S score elements per block.
    w_scaled = weight.astype(jnp.float32) * (1.0 / (H ** 0.5))

    # NOTE: S and H are kept whole per block (they equal the full array dims,
    # satisfying the (8,128) rule even at small test shapes). For very large
    # S*H, add an H (reduction) grid axis + (TB,S) scratch accumulator; at
    # production shapes S should be a multiple of 128 for lane-dense stores.
    return pl.pallas_call(
        _dot_attention_kernel,
        out_shape=jax.ShapeDtypeStruct((B, S), jnp.float32),
        grid=grid,
        in_specs=[
            pl.BlockSpec((tb, S, H), lambda b: (b, 0, 0)),
            pl.BlockSpec((tb, S), lambda b: (b, 0)),
            # Constant index_map: the weight block stays resident in VMEM
            # across grid steps instead of being re-DMA'd.
            pl.BlockSpec((1, H), lambda b: (0, 0)),
        ],
        out_specs=pl.BlockSpec((tb, S), lambda b: (b, 0)),
        compiler_params=pltpu.CompilerParams(
            # Batch blocks are independent -> shard across v7x's 2 TensorCores.
            dimension_semantics=("parallel",),
            vmem_limit_bytes=_VMEM_LIMIT_BYTES,
        ),
    )(hidden, masks, w_scaled)


def _masked_softmax_ref(scores, masks):
    m = masks.astype(jnp.float32)
    p = jax.nn.softmax(scores * m, axis=-1)
    p = p * m
    return p / (jnp.sum(p, axis=-1, keepdims=True) + 1e-13)


if __name__ == "__main__":
    B, S, H = 2, 8, 32
    key = jax.random.PRNGKey(0)
    k_h, k_w = jax.random.split(key, 2)

    hidden = jax.random.normal(k_h, (B, S, H), dtype=jnp.float32)

    # Deterministic Linear(H, 1, bias=False) init, PyTorch-style U(-1/sqrt(H), 1/sqrt(H)).
    bound = 1.0 / (H ** 0.5)
    weight = jax.random.uniform(k_w, (1, H), dtype=jnp.float32,
                                minval=-bound, maxval=bound)

    # Binary padding masks (first row has 2 padded positions, second is full).
    lengths = jnp.array([S - 2, S], dtype=jnp.int32)
    masks = (jnp.arange(S)[None, :] < lengths[:, None]).astype(jnp.float32)

    out = dot_attention(hidden, masks, weight)
    jax.block_until_ready(out)

    # Cross-check against a pure-JAX reference of the PyTorch forward.
    # (Tolerance loosened to 1e-3 to account for the EUP approx reciprocals;
    # real logic errors would be off by >> 1e-1.)
    scores_ref = (hidden @ weight[0]) / (H ** 0.5)
    ref = _masked_softmax_ref(scores_ref, masks)
    assert jnp.allclose(out, ref, atol=1e-3, rtol=1e-3), \
        float(jnp.max(jnp.abs(out - ref)))

    print("KERNEL_OK")
</pallas_src>

<mosaic_0001>
module attributes {stable_mosaic.version = 11 : i64} {
  func.func @_dot_attention_kernel(%arg0: i32, %arg1: memref<2x8x32xf32, #tpu.memory_space<vmem>>, %arg2: memref<2x8xf32, #tpu.memory_space<vmem>>, %arg3: memref<1x32xf32, #tpu.memory_space<vmem>>, %arg4: memref<2x8xf32, #tpu.memory_space<vmem>>) attributes {dimension_semantics = [#tpu.dimension_semantics<parallel>], iteration_bounds = array<i64: 1>, scalar_prefetch = 0 : i64, scratch_operands = 0 : i64, tpu.core_type = #tpu.core_type<tc>, window_params = [{transform_indices = @transform_0, window_bounds = array<i64: 2, 8, 32>}, {transform_indices = @transform_1, window_bounds = array<i64: 2, 8>}, {pipeline_mode = #tpu.pipeline_mode<synchronous>, transform_indices = @transform_2, window_bounds = array<i64: 1, 32>}, {transform_indices = @transform_3, window_bounds = array<i64: 2, 8>}]} {
    %c0 = arith.constant 0 : index
    %c0_0 = arith.constant 0 : index
    %c0_1 = arith.constant 0 : index
    %0 = vector.load %arg1[%c0, %c0_0, %c0_1] : memref<2x8x32xf32, #tpu.memory_space<vmem>>, vector<2x8x32xf32>
    %c0_2 = arith.constant 0 : index
    %c0_3 = arith.constant 0 : index
    %1 = vector.load %arg2[%c0_2, %c0_3] : memref<2x8xf32, #tpu.memory_space<vmem>>, vector<2x8xf32>
    %c0_4 = arith.constant 0 : index
    %c0_5 = arith.constant 0 : index
    %2 = vector.load %arg3[%c0_4, %c0_5] : memref<1x32xf32, #tpu.memory_space<vmem>>, vector<1x32xf32>
    %3 = vector.shape_cast %2 : vector<1x32xf32> to vector<1x1x32xf32>
    %4 = vector.broadcast %3 : vector<1x1x32xf32> to vector<2x8x32xf32>
    %5 = arith.mulf %0, %4 : vector<2x8x32xf32>
    %cst = arith.constant dense<0.000000e+00> : vector<2x8xf32>
    %6 = vector.multi_reduction <add>, %5, %cst [2] : vector<2x8x32xf32> to vector<2x8xf32>
    %7 = arith.mulf %6, %1 : vector<2x8xf32>
    %cst_6 = arith.constant dense<0xFF800000> : vector<2xf32>
    %8 = vector.multi_reduction <maximumf>, %7, %cst_6 [1] : vector<2x8xf32> to vector<2xf32>
    %9 = vector.shape_cast %8 : vector<2xf32> to vector<2x1xf32>
    %10 = vector.broadcast %9 : vector<2x1xf32> to vector<2x8xf32>
    %11 = arith.subf %7, %10 : vector<2x8xf32>
    %12 = math.exp %11 : vector<2x8xf32>
    %cst_7 = arith.constant dense<0.000000e+00> : vector<2xf32>
    %13 = vector.multi_reduction <add>, %12, %cst_7 [1] : vector<2x8xf32> to vector<2xf32>
    %14 = vector.shape_cast %13 : vector<2xf32> to vector<2x1xf32>
    %15 = tpu.reciprocal %14 {approx = true} : vector<2x1xf32> -> vector<2x1xf32>
    %16 = vector.broadcast %15 : vector<2x1xf32> to vector<2x8xf32>
    %17 = arith.mulf %12, %16 : vector<2x8xf32>
    %18 = arith.mulf %17, %1 : vector<2x8xf32>
    %cst_8 = arith.constant dense<0.000000e+00> : vector<2xf32>
    %19 = vector.multi_reduction <add>, %18, %cst_8 [1] : vector<2x8xf32> to vector<2xf32>
    %20 = vector.shape_cast %19 : vector<2xf32> to vector<2x1xf32>
    %cst_9 = arith.constant 9.99999982E-14 : f32
    %21 = vector.broadcast %cst_9 : f32 to vector<2x1xf32>
    %22 = arith.addf %20, %21 : vector<2x1xf32>
    %23 = tpu.reciprocal %22 {approx = true} : vector<2x1xf32> -> vector<2x1xf32>
    %24 = vector.broadcast %23 : vector<2x1xf32> to vector<2x8xf32>
    %25 = arith.mulf %18, %24 : vector<2x8xf32>
    %c0_10 = arith.constant 0 : index
    %c0_11 = arith.constant 0 : index
    %26 = vector.load %arg4[%c0_10, %c0_11] : memref<2x8xf32, #tpu.memory_space<vmem>>, vector<2x8xf32>
    tpu.vector_store %arg4[%c0_10, %c0_11], %25 {strides = array<i32>} : memref<2x8xf32, #tpu.memory_space<vmem>>, vector<2x8xf32>,
    return
  }
  func.func @transform_0(%arg0: i32) -> (i32, i32, i32) {
    %c0_i32 = arith.constant 0 : i32
    %c0_i32_0 = arith.constant 0 : i32
    %c0_i32_1 = arith.constant 0 : i32
    return %arg0, %c0_i32, %c0_i32_0 : i32, i32, i32
  }
  func.func @transform_1(%arg0: i32) -> (i32, i32) {
    %c0_i32 = arith.constant 0 : i32
    %c0_i32_0 = arith.constant 0 : i32
    return %arg0, %c0_i32 : i32, i32
  }
  func.func @transform_2(%arg0: i32) -> (i32, i32) {
    %c0_i32 = arith.constant 0 : i32
    %c0_i32_0 = arith.constant 0 : i32
    %c0_i32_1 = arith.constant 0 : i32
    return %c0_i32, %c0_i32_0 : i32, i32
  }
  func.func @transform_3(%arg0: i32) -> (i32, i32) {
    %c0_i32 = arith.constant 0 : i32
    %c0_i32_0 = arith.constant 0 : i32
    return %arg0, %c0_i32 : i32, i32
  }
}

</mosaic_0001>

<llo_original>
// kernel: tpu_custom_call.1
$region0: #{tpu_custom_call.1}
  #allocation0 [shape = 'u32[]', space=smem, size = 0x4, offset = 0x4, fixed_abs, tag = 'smem constant byte address 0x4 - core index']
  #allocation1 [shape = 'u32[72,128]{1,0:T(1,128)}', space=vmem, size = 0x9000, scoped, tag = 'internal scratch']
  %s0 = inlined_call_operand.hbm [shape: f32[2,8,32], index: 0, kind: input, shape index: {}]
  %s1 = inlined_call_operand.hbm [shape: f32[2,8], index: 1, kind: input, shape index: {}]
  %s2 = inlined_call_operand.vmem [shape: f32[1,32], index: 2, kind: input, shape index: {}]
  %s3 = inlined_call_operand.hbm [shape: f32[2,8], index: 3, kind: output, shape index: {}]
  %s4 = sld [smem:[#allocation0]]
  $region30: #{tpu_custom_call.1} parent=0
    _
  %s6 = ssub.s32 1, %s4
  %s7 = scalar_select 0, %s6, %s4
  $region1: #{tpu_custom_call.1} parent=0
    #allocation2 [shape = 'u8[8192]{0}', space=vmem, size = 0x2000, scoped, tag = 'input window, operand 0, single buffered']
    #allocation3 [shape = 's32[1]{0}', space=sflag, size = 0x4, scoped, tag = 'scoped memory for tpu_custom_call.1']
    #allocation4 [shape = 's32[1]{0}', space=sflag, size = 0x4, scoped, tag = 'scoped memory for tpu_custom_call.1']
    #allocation5 [shape = 'u8[1024]{0}', space=vmem, size = 0x400, scoped, tag = 'input window, operand 1, single buffered']
    #allocation6 [shape = 's32[1]{0}', space=sflag, size = 0x4, scoped, tag = 'scoped memory for tpu_custom_call.1']
    #allocation7 [shape = 'u8[1024]{0}', space=vmem, size = 0x400, scoped, tag = 'output window, operand 0, single buffered']
    %8 = vsyncpa [#allocation3], 0
    %9 = vsyncpa [#allocation6], 0
    %10 = vsyncpa [#allocation4], 0
    // Predicated region
    $region2: #{tpu_custom_call.1} parent=1 // pred_check
      _
    $region3: #{tpu_custom_call.1} parent=1 // pred_check_branch
      %12 = sbr.rel (0) target = $region5
    $region4: #{tpu_custom_call.1} parent=1 // pred_region
      %14 = vsyncadd [#allocation3], 0
      %s15 = sshll.u32 %s0, 4
      %s16 = int_to_ptr.hbm [resolvable:$true] %s15
      %s17 = sshll.u32 [#allocation2], 4
      %s18 = int_to_ptr.vmem [resolvable:$true] %s17
      %23 = dma.hbm_to_vmem [thread:$0]  %s16, 256, %s18, [#allocation3], 128, 128, 8
    $region5: #{tpu_custom_call.1} parent=1 // pred_fallthru
      _
    // Predicated region
    $region6: #{tpu_custom_call.1} parent=1 // pred_check
      _
    $region7: #{tpu_custom_call.1} parent=1 // pred_check_branch
      %25 = sbr.rel (0) target = $region9
    $region8: #{tpu_custom_call.1} parent=1 // pred_region
      %27 = vsyncadd [#allocation6], 0
      %s29 = sshll.u32 %s1, 4
      %s30 = int_to_ptr.hbm [resolvable:$true] %s29
      %s31 = sshll.u32 [#allocation5], 4
      %s32 = int_to_ptr.vmem [resolvable:$true] %s31
      %34 = dma.hbm_to_vmem [thread:$0]  %s30, 32, %s32, [#allocation6]
    $region9: #{tpu_custom_call.1} parent=1 // pred_fallthru
      _
    // Predicated region
    $region10: #{tpu_custom_call.1} parent=1 // pred_check
      _
    $region11: #{tpu_custom_call.1} parent=1 // pred_check_branch
      %36 = sbr.rel (0) target = $region13
    $region12: #{tpu_custom_call.1} parent=1 // pred_region
      _
    $region13: #{tpu_custom_call.1} parent=1 // pred_fallthru
      _
    // Predicated region
    $region14: #{tpu_custom_call.1} parent=1 // pred_check
      _
    $region15: #{tpu_custom_call.1} parent=1 // pred_check_branch
      %38 = sbr.rel (0) target = $region17
    $region16: #{tpu_custom_call.1} parent=1 // pred_region
      %40 = dma.done [#allocation3], 256
    $region17: #{tpu_custom_call.1} parent=1 // pred_fallthru
      _
    // Predicated region
    $region18: #{tpu_custom_call.1} parent=1 // pred_check
      _
    $region19: #{tpu_custom_call.1} parent=1 // pred_check_branch
      %42 = sbr.rel (0) target = $region21
    $region20: #{tpu_custom_call.1} parent=1 // pred_region
      %44 = dma.done [#allocation6], 32
    $region21: #{tpu_custom_call.1} parent=1 // pred_fallthru
      _
    %v45 = vld [vmem:[#allocation2] sm:$0xff]
    %v46 = vld [vmem:[#allocation2 + $0x8] sm:$0xff]
    %v47 = vld [vmem:[#allocation5] sm:$0x3]
    %v48 = vld [vmem:[%s2] sm:$0x1]
    %v50 = vperm.slane %v48, 0
    %v52 = vmul.f32 %v45, %v50
    %v53 = vmul.f32 %v46, %v50
    %vm54 = vcmask 261120
    %v55 = vsel %vm54, %v52, 0.0
    %56 = vadd.xlane.f32.xlu0 %v55
    %v57 = vpop.xlane.xlu0 %56
    %v58 = vsel %vm54, %v53, 0.0
    %59 = vadd.xlane.f32.xlu0 %v58
    %v60 = vpop.xlane.xlu0 %59
    %v62 = vperm.slane %v47, 0
    %v63 = vlaneseq
    %v64 = vshrl.u32 %v63, 7
    %66 = vset.pattern.permute.xlu0 %v64
    %67 = vperm.xlu0 %66, %v62
    %v68 = vpop.permute.xlu0 %67
    %v69 = vperm.slane %v47, 1
    %v70 = vlaneseq
    %v71 = vshrl.u32 %v70, 7
    %73 = vset.pattern.permute.xlu0 %v71
    %74 = vperm.xlu0 %73, %v69
    %v75 = vpop.permute.xlu0 %74
    %v78 = vmul.f32 %v57, %v68
    %v79 = vmul.f32 %v60, %v75
    %82 = vset.pattern.permute.xlu0 0
    %83 = vperm.xlu0 %82, %v78
    %v84 = vpop.permute.xlu0 %83
    %85 = vset.pattern.permute.xlu0 0
    %86 = vperm.xlu0 %85, %v79
    %v87 = vpop.permute.xlu0 %86
    %v88 = vlaneseq
    %v89 = vand.u32 %v88, 127
    %v90 = vperm.slane %v84, %v89
    %v91 = vperm.slane %v87, %v89
    %vm92 = vcmask 1041409
    %v93 = vsel %vm92, %v91, %v90
    %vm95 = vcmask 58368
    %v96 = vsel %vm95, %v93, -inf
    %97 = vmax.xlane.f32.xlu0 %v96
    %v98 = vpop.xlane.xlu0 %97
    %v100 = vperm.slane %v98, 0
    %v101 = vperm.slane %v98, 1
    %v104 = vsub.f32 %v78, %v100
    %v105 = vsub.f32 %v79, %v101
    %v106 = vmul.f32 %v104, 1.442695
    %v107 = vpow.pop %v106
    %v108 = vmul.f32 %v105, 1.442695
    %v109 = vpow.pop %v108
    %112 = vset.pattern.permute.xlu0 0
    %113 = vperm.xlu0 %112, %v107
    %v114 = vpop.permute.xlu0 %113
    %115 = vset.pattern.permute.xlu0 0
    %116 = vperm.xlu0 %115, %v109
    %v117 = vpop.permute.xlu0 %116
    %v118 = vperm.slane %v114, %v89
    %v119 = vperm.slane %v117, %v89
    %v120 = vsel %vm92, %v119, %v118
    %v122 = vsel %vm95, %v120, 0.0
    %123 = vadd.xlane.f32.xlu0 %v122
    %v124 = vpop.xlane.xlu0 %123
    %v125 = vrcp.pop %v124
    %v127 = vperm.slane %v125, 0
    %v128 = vperm.slane %v125, 1
    %v131 = vmul.f32 %v107, %v127
    %v132 = vmul.f32 %v109, %v128
    %v133 = vmul.f32 %v131, %v68
    %v134 = vmul.f32 %v132, %v75
    %137 = vset.pattern.permute.xlu0 0
    %138 = vperm.xlu0 %137, %v133
    %v139 = vpop.permute.xlu0 %138
    %140 = vset.pattern.permute.xlu0 0
    %141 = vperm.xlu0 %140, %v134
    %v142 = vpop.permute.xlu0 %141
    %v143 = vperm.slane %v139, %v89
    %v144 = vperm.slane %v142, %v89
    %v145 = vsel %vm92, %v144, %v143
    %v147 = vsel %vm95, %v145, 0.0
    %148 = vadd.xlane.f32.xlu0 %v147
    %v149 = vpop.xlane.xlu0 %148
    %v150 = vadd.f32 %v149, 1e-13
    %v151 = vrcp.pop %v150
    %v153 = vperm.slane %v151, 0
    %v154 = vperm.slane %v151, 1
    %v157 = vmul.f32 %v133, %v153
    %v158 = vmul.f32 %v134, %v154
    %161 = vset.pattern.permute.xlu0 0
    %162 = vperm.xlu0 %161, %v157
    %v163 = vpop.permute.xlu0 %162
    %164 = vset.pattern.permute.xlu0 0
    %165 = vperm.xlu0 %164, %v158
    %v166 = vpop.permute.xlu0 %165
    %v167 = vperm.slane %v163, %v89
    %v168 = vperm.slane %v166, %v89
    %v169 = vsel %vm92, %v168, %v167
    %171 = vst.msk [vmem:[#allocation7] sm:$0x3] %vm95, %v169
    // Predicated region
    $region22: #{tpu_custom_call.1} parent=1 // pred_check
      _
    $region23: #{tpu_custom_call.1} parent=1 // pred_check_branch
      %173 = sbr.rel (0) target = $region25
    $region24: #{tpu_custom_call.1} parent=1 // pred_region
      %175 = vsyncadd [#allocation4], 0
      %s177 = sshll.u32 [#allocation7], 4
      %s178 = int_to_ptr.vmem [resolvable:$true] %s177
      %s179 = sshll.u32 %s3, 4
      %s180 = int_to_ptr.hbm [resolvable:$true] %s179
      %182 = dma.vmem_to_hbm [thread:$0]  %s178, 32, %s180, [#allocation4]
    $region25: #{tpu_custom_call.1} parent=1 // pred_fallthru
      _
    // Predicated region
    $region26: #{tpu_custom_call.1} parent=1 // pred_check
      _
    $region27: #{tpu_custom_call.1} parent=1 // pred_check_branch
      %184 = sbr.rel (0) target = $region29
    $region28: #{tpu_custom_call.1} parent=1 // pred_region
      %186 = dma.done [#allocation4], 32
    $region29: #{tpu_custom_call.1} parent=1 // pred_fallthru
      _
    %187 = vsyncpa [#allocation3], 1
    %188 = vsyncpa [#allocation6], 1
    %189 = vsyncpa [#allocation4], 1

</llo_original>
